<compile_context>
chip_gen: v5e
topology: v5e:2x2
jax: 0.10.0
libtpu: 0.0.40
codegen_flags: <defaults>
</compile_context>

<pallas_src>
import functools
import math

import jax
import jax.numpy as jnp
from jax.experimental import pallas as pl
from jax.experimental.pallas import tpu as pltpu

_LANES = 128


# ---------------------------------------------------------------------------
# In-kernel helpers: temporal shift / k-tap stacking (static slice + concat)
# ---------------------------------------------------------------------------

def _shift_t(x, d):
    """y[:, t] = x[:, t + d], zero outside [0, T)."""
    if d == 0:
        return x
    C, T = x.shape
    z = jnp.zeros((C, abs(d)), x.dtype)
    if d > 0:
        return jnp.concatenate([x[:, d:], z], axis=1)
    return jnp.concatenate([z, x[:, :T + d]], axis=1)


def _stack_taps(x, k):
    """X_stack[tau*C:(tau+1)*C, t] = x[:, t + tau - k//2] (temporal im2col)."""
    if k == 1:
        return x
    return jnp.concatenate([_shift_t(x, tau - k // 2) for tau in range(k)], axis=0)


# ---------------------------------------------------------------------------
# Fused Pallas kernel (one batch element per grid step)
# ---------------------------------------------------------------------------

def _make_kernel(dims, off):
    Cv, Ca, Cvr, Car, T, r, k0, k1, T_pad = (
        dims["Cv"], dims["Ca"], dims["Cvr"], dims["Car"], dims["T"],
        dims["r"], dims["k0"], dims["k1"], dims["T_pad"])
    f32 = jnp.float32

    def kernel(xv_ref, xa_ref, slab_ref, out_ref):
        slab = slab_ref[...]                                       # (R, 128) constants
        wg  = slab[off["wg"]:off["wg"] + Cv, :Cv]                  # (Cv, Cv)
        wap = slab[off["wap"]:off["wap"] + Ca, :r * Ca]            # (Ca, r*Ca)
        wa  = slab[off["wa"]:off["wa"] + Cvr + Car, :k0 * (Cv + Ca)]
        wb  = slab[off["wb"]:off["wb"] + Cv, :k1 * (Cvr + Car)]
        bg  = slab[off["bg"]:off["bg"] + Cv, :1]
        bap = slab[off["bap"]:off["bap"] + Ca, :1]
        ba  = slab[off["ba"]:off["ba"] + Cvr + Car, :1]

        # ---- visual branch: pool(H,W), global pool, 1x1x1 conv g ----------
        xv = xv_ref[0]                                             # (Cv, T, HW)
        xv_pool = jnp.mean(xv, axis=-1)                            # (Cv, T)
        xv_glob = jnp.mean(xv_pool, axis=-1, keepdims=True)        # (Cv, 1)
        g = jnp.dot(wg, xv_glob, preferred_element_type=f32) + bg  # (Cv, 1)
        xv2 = xv_pool + g                                          # (Cv, T)

        # ---- audio branch: freq pool + strided audio_proj (1 matmul) ------
        xa = xa_ref[0]                                             # (r*Ca, T, F) tap-major
        xa_m = jnp.mean(xa, axis=-1)                               # (r*Ca, T)
        xa_proj = jnp.dot(wap, xa_m, preferred_element_type=f32) + bap   # (Ca, T)

        # ---- fused visual_a + audio_a (inference BN folded) + ReLU --------
        x_av = jnp.concatenate([xv2, xa_proj], axis=0)             # (Cv+Ca, T)
        xs_a = _stack_taps(x_av, k0)                               # (k0*(Cv+Ca), T)
        x_a = jnp.maximum(jnp.dot(wa, xs_a, preferred_element_type=f32) + ba, 0.0)

        # ---- conv b (full channel block, single matmul) + 1 ---------------
        xs_b = _stack_taps(x_a, k1)                                # (k1*(Cvr+Car), T)
        out = jnp.dot(wb, xs_b, preferred_element_type=f32) + 1.0  # (Cv, T)

        if T_pad > T:                                              # lane-dense store
            out = jnp.concatenate([out, jnp.zeros((Cv, T_pad - T), f32)], axis=1)
        out_ref[0] = out.astype(out_ref.dtype)

    return kernel


# ---------------------------------------------------------------------------
# Wrapper: weight folding, constant-slab packing, one pallas_call
# ---------------------------------------------------------------------------

def _pack_slab(consts):
    """Pack named (rows, cols<=128) f32 matrices into one (R, 128) slab.
    Each block starts on an 8-row boundary. Returns (slab, static offsets)."""
    blocks, offsets, row = [], {}, 0
    for name, arr in consts:
        arr = jnp.asarray(arr, jnp.float32)
        r_, c_ = arr.shape
        assert c_ <= _LANES, f"{name}: {c_} > {_LANES} lanes"
        offsets[name] = row
        blocks.append(jnp.pad(arr, ((0, (-r_) % 8), (0, _LANES - c_))))
        row += r_ + ((-r_) % 8)
    return jnp.concatenate(blocks, axis=0), offsets


def av2v_routefunc_audioconvdown_forward(xv, xa, params, *, video_length,
                                         kernel_size=(1, 1), bn_eps=1e-5):
    B, Cv, T, H, W = xv.shape
    _, Ca, L, F = xa.shape
    Tv = video_length
    assert T == Tv, "video temporal length must equal video_length"
    r = math.ceil(L / Tv)
    Lp = r * Tv
    k0, k1 = kernel_size
    assert k0 % 2 == 1 and k1 % 2 == 1, "temporal kernels assumed odd (or 1)"
    Cvr = params["visual_a_w"].shape[0]
    Car = params["audio_a_w"].shape[0]
    assert params["b_w"].shape[1] == Cvr + Car
    assert max(k0 * (Cv + Ca), k1 * (Cvr + Car), r * Ca, Cv) <= _LANES
    f32 = jnp.float32

    # ---- g (1x1x1 conv) ----
    w_g = params["g_w"][:, :, 0, 0, 0].astype(f32)                     # (Cv, Cv)
    b_g = params["g_b"].astype(f32).reshape(Cv, 1)

    # ---- audio_proj: r strided taps concatenated -> one (Ca, r*Ca) matmul ----
    w_ap = jnp.concatenate([params["audio_proj_w"][:, :, j, 0]
                            for j in range(r)], axis=1).astype(f32)    # (Ca, r*Ca)
    b_ap = params["audio_proj_b"].astype(f32).reshape(Ca, 1)

    # ---- visual_a + audio_a fused (block-diag per tap, BN folded), taps concatenated ----
    scale_v = params["va_gamma"] / jnp.sqrt(params["va_var"] + bn_eps)
    scale_a = params["aa_gamma"] / jnp.sqrt(params["aa_var"] + bn_eps)
    w_a = jnp.zeros((Cvr + Car, k0 * (Cv + Ca)), f32)
    for tau in range(k0):
        base = tau * (Cv + Ca)
        w_a = w_a.at[:Cvr, base:base + Cv].set(
            params["visual_a_w"][:, :, tau, 0, 0] * scale_v[:, None])
        w_a = w_a.at[Cvr:, base + Cv:base + Cv + Ca].set(
            params["audio_a_w"][:, :, tau, 0, 0] * scale_a[:, None])
    b_a = jnp.concatenate(
        [scale_v * (params["visual_a_b"] - params["va_mean"]) + params["va_beta"],
         scale_a * (params["audio_a_b"] - params["aa_mean"]) + params["aa_beta"]],
        axis=0).astype(f32).reshape(Cvr + Car, 1)

    # ---- conv b: taps concatenated, full (unsplit) channel block ----
    w_b = jnp.concatenate([params["b_w"][:, :, tau, 0, 0]
                           for tau in range(k1)], axis=1).astype(f32)  # (Cv, k1*(Cvr+Car))

    slab, off = _pack_slab([("wg", w_g), ("wap", w_ap), ("wa", w_a), ("wb", w_b),
                            ("bg", b_g), ("bap", b_ap), ("ba", b_a)])
    R = slab.shape[0]

    # ---- lane-dense input layouts ----
    xv_flat = xv.reshape(B, Cv, T, H * W).astype(f32)                  # spatial -> lanes
    # pad audio time to r*Tv, lay out tap-major: (B, r*Ca, Tv, F), row j*Ca+i <-> tap j, ch i
    xa_p = jnp.pad(xa.astype(f32), ((0, 0), (0, 0), (0, Lp - L), (0, 0)))
    xa_taps = (xa_p.reshape(B, Ca, Tv, r, F)
               .transpose(0, 3, 1, 2, 4)
               .reshape(B, r * Ca, Tv, F))

    T_pad = max(_LANES, ((T + _LANES - 1) // _LANES) * _LANES)
    dims = dict(Cv=Cv, Ca=Ca, Cvr=Cvr, Car=Car, T=T, r=r, k0=k0, k1=k1, T_pad=T_pad)
    kernel = _make_kernel(dims, off)

    # grid over batch: both TensorCores busy on v7x; negligible per-step cost on
    # single-core v5e/v6e at these batch sizes.
    out = pl.pallas_call(
        kernel,
        out_shape=jax.ShapeDtypeStruct((B, Cv, T_pad), f32),
        grid=(B,),
        in_specs=[
            pl.BlockSpec((1, Cv, T, H * W), lambda b: (b, 0, 0, 0)),
            pl.BlockSpec((1, r * Ca, Tv, F), lambda b: (b, 0, 0, 0)),
            pl.BlockSpec((R, _LANES), lambda b: (0, 0)),       # constants, resident
        ],
        out_specs=pl.BlockSpec((1, Cv, T_pad), lambda b: (b, 0, 0)),
        compiler_params=pltpu.CompilerParams(dimension_semantics=("parallel",)),
    )(xv_flat, xa_taps, slab)

    return out[:, :, :T].reshape(B, Cv, T, 1, 1)


# ---------------------------------------------------------------------------
# Pure-JAX reference reproducing the PyTorch forward (convs via lax.conv)
# ---------------------------------------------------------------------------

def _bn_inference(x, gamma, beta, mean, var, eps):
    shape = (1, gamma.shape[0]) + (1,) * (x.ndim - 2)
    return ((x - mean.reshape(shape)) / jnp.sqrt(var.reshape(shape) + eps)
            * gamma.reshape(shape) + beta.reshape(shape))


def reference(xv, xa, p, *, video_length, kernel_size, bn_eps):
    B, Cv, T, H, W = xv.shape
    _, Ca, L, F = xa.shape
    r = math.ceil(L / video_length)
    pad_len = r * video_length - L
    k0, k1 = kernel_size

    xa_p = jnp.pad(xa, ((0, 0), (0, 0), (0, pad_len), (0, 0)))
    xa_c = jax.lax.conv_general_dilated(
        xa_p, p["audio_proj_w"], window_strides=(r, 1), padding="VALID",
        dimension_numbers=("NCHW", "OIHW", "NCHW"))
    xa_c = xa_c + p["audio_proj_b"].reshape(1, Ca, 1, 1)
    xa_c = jnp.mean(xa_c, axis=-1, keepdims=True)[..., None]            # (B,Ca,Tv,1,1)

    xv_p = jnp.mean(xv, axis=(3, 4), keepdims=True)                     # (B,Cv,T,1,1)
    xv_g = jnp.mean(xv_p, axis=2, keepdims=True)                        # (B,Cv,1,1,1)
    g = (jnp.einsum("oi,bidhw->bodhw", p["g_w"][:, :, 0, 0, 0], xv_g)
         + p["g_b"].reshape(1, Cv, 1, 1, 1))
    xv2 = xv_p + g

    def conv3d_t(x, w, k):
        return jax.lax.conv_general_dilated(
            x, w, window_strides=(1, 1, 1),
            padding=((k // 2, k // 2), (0, 0), (0, 0)),
            dimension_numbers=("NCDHW", "OIDHW", "NCDHW"))

    xv_a = conv3d_t(xv2, p["visual_a_w"], k0) + p["visual_a_b"].reshape(1, -1, 1, 1, 1)
    xv_a = _bn_inference(xv_a, p["va_gamma"], p["va_beta"], p["va_mean"], p["va_var"], bn_eps)
    xa_a = conv3d_t(xa_c, p["audio_a_w"], k0) + p["audio_a_b"].reshape(1, -1, 1, 1, 1)
    xa_a = _bn_inference(xa_a, p["aa_gamma"], p["aa_beta"], p["aa_mean"], p["aa_var"], bn_eps)

    x = jnp.maximum(jnp.concatenate([xv_a, xa_a], axis=1), 0.0)
    return conv3d_t(x, p["b_w"], k1) + 1.0                               # (B,Cv,T,1,1)


if __name__ == "__main__":
    # Small config: visual_c_in = audio_c_in = 8, ratio = 2, video_length = 8,
    # audio_length = 14 -> r = 2, pad = 2; kernel_size = [3, 3]; H*W = 256 lanes.
    B, Cv, Ca = 2, 8, 8
    ratio = 2
    Tv, H, W = 8, 16, 16
    L, F = 14, 128
    k0, k1 = 3, 3
    bn_eps = 1e-5
    Cvr, Car = Cv // ratio, Ca // ratio
    r = math.ceil(L / Tv)

    ks = jax.random.split(jax.random.PRNGKey(0), 20)
    nrm = jax.random.normal
    xv = nrm(ks[0], (B, Cv, Tv, H, W), jnp.float32)
    xa = nrm(ks[1], (B, Ca, L, F), jnp.float32)
    params = dict(
        g_w=0.1 * nrm(ks[2], (Cv, Cv, 1, 1, 1), jnp.float32),
        g_b=0.1 * nrm(ks[3], (Cv,), jnp.float32),
        audio_proj_w=0.1 * nrm(ks[4], (Ca, Ca, r, 1), jnp.float32),
        audio_proj_b=0.1 * nrm(ks[5], (Ca,), jnp.float32),
        visual_a_w=0.1 * nrm(ks[6], (Cvr, Cv, k0, 1, 1), jnp.float32),
        visual_a_b=0.1 * nrm(ks[7], (Cvr,), jnp.float32),
        audio_a_w=0.1 * nrm(ks[8], (Car, Ca, k0, 1, 1), jnp.float32),
        audio_a_b=0.1 * nrm(ks[9], (Car,), jnp.float32),
        va_gamma=1.0 + 0.1 * nrm(ks[10], (Cvr,), jnp.float32),
        va_beta=0.1 * nrm(ks[11], (Cvr,), jnp.float32),
        va_mean=0.1 * nrm(ks[12], (Cvr,), jnp.float32),
        va_var=1.0 + 0.1 * jnp.abs(nrm(ks[13], (Cvr,), jnp.float32)),
        aa_gamma=1.0 + 0.1 * nrm(ks[14], (Car,), jnp.float32),
        aa_beta=0.1 * nrm(ks[15], (Car,), jnp.float32),
        aa_mean=0.1 * nrm(ks[16], (Car,), jnp.float32),
        aa_var=1.0 + 0.1 * jnp.abs(nrm(ks[17], (Car,), jnp.float32)),
        # Module zero-inits b.weight (residual-style); random values used here so
        # the kernel computes something non-trivial — conv semantics unchanged.
        b_w=0.1 * nrm(ks[18], (Cv, Cvr + Car, k1, 1, 1), jnp.float32),
    )

    fwd = jax.jit(functools.partial(
        av2v_routefunc_audioconvdown_forward,
        video_length=Tv, kernel_size=(k0, k1), bn_eps=bn_eps))
    out = fwd(xv, xa, params)
    jax.block_until_ready(out)

    ref = reference(xv, xa, params, video_length=Tv, kernel_size=(k0, k1), bn_eps=bn_eps)
    assert out.shape == (B, Cv, Tv, 1, 1)
    err = float(jnp.max(jnp.abs(out - ref)))
    assert jnp.allclose(out, ref, atol=1e-3, rtol=1e-3), err
    print("KERNEL_OK")
</pallas_src>

<mosaic_0001>
module attributes {stable_mosaic.version = 11 : i64} {
  func.func @kernel(%arg0: i32, %arg1: memref<1x8x8x256xf32, #tpu.memory_space<vmem>>, %arg2: memref<1x16x8x128xf32, #tpu.memory_space<vmem>>, %arg3: memref<56x128xf32, #tpu.memory_space<vmem>>, %arg4: memref<1x8x128xf32, #tpu.memory_space<vmem>>) attributes {dimension_semantics = [#tpu.dimension_semantics<parallel>], iteration_bounds = array<i64: 2>, scalar_prefetch = 0 : i64, scratch_operands = 0 : i64, tpu.core_type = #tpu.core_type<tc>, window_params = [{transform_indices = @transform_0, window_bounds = array<i64: 1, 8, 8, 256>}, {transform_indices = @transform_1, window_bounds = array<i64: 1, 16, 8, 128>}, {pipeline_mode = #tpu.pipeline_mode<synchronous>, transform_indices = @transform_2, window_bounds = array<i64: 56, 128>}, {transform_indices = @transform_3, window_bounds = array<i64: 1, 8, 128>}]} {
    %c0 = arith.constant 0 : index
    %c0_0 = arith.constant 0 : index
    %0 = vector.load %arg3[%c0, %c0_0] : memref<56x128xf32, #tpu.memory_space<vmem>>, vector<56x128xf32>
    %1 = vector.extract_strided_slice %0 {offsets = [0, 0], sizes = [8, 8], strides = [1, 1]} : vector<56x128xf32> to vector<8x8xf32>
    %2 = vector.extract_strided_slice %0 {offsets = [8, 0], sizes = [8, 16], strides = [1, 1]} : vector<56x128xf32> to vector<8x16xf32>
    %3 = vector.extract_strided_slice %0 {offsets = [16, 0], sizes = [8, 48], strides = [1, 1]} : vector<56x128xf32> to vector<8x48xf32>
    %4 = vector.extract_strided_slice %0 {offsets = [24, 0], sizes = [8, 24], strides = [1, 1]} : vector<56x128xf32> to vector<8x24xf32>
    %5 = vector.extract_strided_slice %0 {offsets = [32, 0], sizes = [8, 1], strides = [1, 1]} : vector<56x128xf32> to vector<8x1xf32>
    %6 = vector.extract_strided_slice %0 {offsets = [40, 0], sizes = [8, 1], strides = [1, 1]} : vector<56x128xf32> to vector<8x1xf32>
    %7 = vector.extract_strided_slice %0 {offsets = [48, 0], sizes = [8, 1], strides = [1, 1]} : vector<56x128xf32> to vector<8x1xf32>
    %c0_1 = arith.constant 0 : index
    %c0_2 = arith.constant 0 : index
    %c0_3 = arith.constant 0 : index
    %c0_4 = arith.constant 0 : index
    %8 = vector.load %arg1[%c0_1, %c0_2, %c0_3, %c0_4] : memref<1x8x8x256xf32, #tpu.memory_space<vmem>>, vector<1x8x8x256xf32>
    %9 = vector.shape_cast %8 : vector<1x8x8x256xf32> to vector<8x8x256xf32>
    %cst = arith.constant dense<0.000000e+00> : vector<8x8xf32>
    %10 = vector.multi_reduction <add>, %9, %cst [2] : vector<8x8x256xf32> to vector<8x8xf32>
    %cst_5 = arith.constant 2.560000e+02 : f32
    %11 = vector.broadcast %cst_5 : f32 to vector<8x8xf32>
    %12 = arith.divf %10, %11 : vector<8x8xf32>
    %cst_6 = arith.constant dense<0.000000e+00> : vector<8xf32>
    %13 = vector.multi_reduction <add>, %12, %cst_6 [1] : vector<8x8xf32> to vector<8xf32>
    %14 = vector.shape_cast %13 : vector<8xf32> to vector<8x1xf32>
    %cst_7 = arith.constant 8.000000e+00 : f32
    %15 = vector.broadcast %cst_7 : f32 to vector<8x1xf32>
    %16 = arith.divf %14, %15 : vector<8x1xf32>
    %cst_8 = arith.constant dense<0.000000e+00> : vector<8x1xf32>
    %17 = tpu.matmul %1, %16, %cst_8 {dimension_numbers = #tpu.dot_dimension_numbers<[1], [0], [0], [1], [0, 0, 1, 1], [], []>} : vector<8x8xf32>, vector<8x1xf32>, vector<8x1xf32> -> vector<8x1xf32>
    %18 = arith.addf %17, %5 : vector<8x1xf32>
    %19 = vector.broadcast %18 : vector<8x1xf32> to vector<8x8xf32>
    %20 = arith.addf %12, %19 : vector<8x8xf32>
    %c0_9 = arith.constant 0 : index
    %c0_10 = arith.constant 0 : index
    %c0_11 = arith.constant 0 : index
    %c0_12 = arith.constant 0 : index
    %21 = vector.load %arg2[%c0_9, %c0_10, %c0_11, %c0_12] : memref<1x16x8x128xf32, #tpu.memory_space<vmem>>, vector<1x16x8x128xf32>
    %22 = vector.shape_cast %21 : vector<1x16x8x128xf32> to vector<16x8x128xf32>
    %cst_13 = arith.constant dense<0.000000e+00> : vector<16x8xf32>
    %23 = vector.multi_reduction <add>, %22, %cst_13 [2] : vector<16x8x128xf32> to vector<16x8xf32>
    %cst_14 = arith.constant 1.280000e+02 : f32
    %24 = vector.broadcast %cst_14 : f32 to vector<16x8xf32>
    %25 = arith.divf %23, %24 : vector<16x8xf32>
    %cst_15 = arith.constant dense<0.000000e+00> : vector<8x8xf32>
    %26 = tpu.matmul %2, %25, %cst_15 {dimension_numbers = #tpu.dot_dimension_numbers<[1], [0], [0], [1], [0, 0, 1, 1], [], []>} : vector<8x16xf32>, vector<16x8xf32>, vector<8x8xf32> -> vector<8x8xf32>
    %27 = vector.broadcast %6 : vector<8x1xf32> to vector<8x8xf32>
    %28 = arith.addf %26, %27 : vector<8x8xf32>
    %29 = tpu.concatenate %20, %28 in 0 : vector<8x8xf32>, vector<8x8xf32> -> vector<16x8xf32>
    %cst_16 = arith.constant 0.000000e+00 : f32
    %30 = vector.broadcast %cst_16 : f32 to vector<16x1xf32>
    %31 = vector.extract_strided_slice %29 {offsets = [0, 0], sizes = [16, 7], strides = [1, 1]} : vector<16x8xf32> to vector<16x7xf32>
    %32 = tpu.concatenate %30, %31 in 1 : vector<16x1xf32>, vector<16x7xf32> -> vector<16x8xf32>
    %cst_17 = arith.constant 0.000000e+00 : f32
    %33 = vector.broadcast %cst_17 : f32 to vector<16x1xf32>
    %34 = vector.extract_strided_slice %29 {offsets = [0, 1], sizes = [16, 7], strides = [1, 1]} : vector<16x8xf32> to vector<16x7xf32>
    %35 = tpu.concatenate %34, %33 in 1 : vector<16x7xf32>, vector<16x1xf32> -> vector<16x8xf32>
    %36 = tpu.concatenate %32, %29, %35 in 0 : vector<16x8xf32>, vector<16x8xf32>, vector<16x8xf32> -> vector<48x8xf32>
    %cst_18 = arith.constant dense<0.000000e+00> : vector<8x8xf32>
    %37 = tpu.matmul %3, %36, %cst_18 {dimension_numbers = #tpu.dot_dimension_numbers<[1], [0], [0], [1], [0, 0, 1, 1], [], []>} : vector<8x48xf32>, vector<48x8xf32>, vector<8x8xf32> -> vector<8x8xf32>
    %38 = vector.broadcast %7 : vector<8x1xf32> to vector<8x8xf32>
    %39 = arith.addf %37, %38 : vector<8x8xf32>
    %cst_19 = arith.constant 0.000000e+00 : f32
    %40 = vector.broadcast %cst_19 : f32 to vector<8x8xf32>
    %41 = arith.maximumf %39, %40 : vector<8x8xf32>
    %cst_20 = arith.constant 0.000000e+00 : f32
    %42 = vector.broadcast %cst_20 : f32 to vector<8x1xf32>
    %43 = vector.extract_strided_slice %41 {offsets = [0, 0], sizes = [8, 7], strides = [1, 1]} : vector<8x8xf32> to vector<8x7xf32>
    %44 = tpu.concatenate %42, %43 in 1 : vector<8x1xf32>, vector<8x7xf32> -> vector<8x8xf32>
    %cst_21 = arith.constant 0.000000e+00 : f32
    %45 = vector.broadcast %cst_21 : f32 to vector<8x1xf32>
    %46 = vector.extract_strided_slice %41 {offsets = [0, 1], sizes = [8, 7], strides = [1, 1]} : vector<8x8xf32> to vector<8x7xf32>
    %47 = tpu.concatenate %46, %45 in 1 : vector<8x7xf32>, vector<8x1xf32> -> vector<8x8xf32>
    %48 = tpu.concatenate %44, %41, %47 in 0 : vector<8x8xf32>, vector<8x8xf32>, vector<8x8xf32> -> vector<24x8xf32>
    %cst_22 = arith.constant dense<0.000000e+00> : vector<8x8xf32>
    %49 = tpu.matmul %4, %48, %cst_22 {dimension_numbers = #tpu.dot_dimension_numbers<[1], [0], [0], [1], [0, 0, 1, 1], [], []>} : vector<8x24xf32>, vector<24x8xf32>, vector<8x8xf32> -> vector<8x8xf32>
    %cst_23 = arith.constant 1.000000e+00 : f32
    %50 = vector.broadcast %cst_23 : f32 to vector<8x8xf32>
    %51 = arith.addf %49, %50 : vector<8x8xf32>
    %cst_24 = arith.constant 0.000000e+00 : f32
    %52 = vector.broadcast %cst_24 : f32 to vector<8x120xf32>
    %53 = tpu.concatenate %51, %52 in 1 : vector<8x8xf32>, vector<8x120xf32> -> vector<8x128xf32>
    %c0_25 = arith.constant 0 : index
    %c0_26 = arith.constant 0 : index
    %c0_27 = arith.constant 0 : index
    %54 = vector.load %arg4[%c0_25, %c0_26, %c0_27] : memref<1x8x128xf32, #tpu.memory_space<vmem>>, vector<1x8x128xf32>
    %55 = vector.shape_cast %54 : vector<1x8x128xf32> to vector<8x128xf32>
    %56 = vector.shape_cast %53 : vector<8x128xf32> to vector<1x8x128xf32>
    tpu.vector_store %arg4[%c0_25, %c0_26, %c0_27], %56 {strides = array<i32>} : memref<1x8x128xf32, #tpu.memory_space<vmem>>, vector<1x8x128xf32>,
    return
  }
  func.func @transform_0(%arg0: i32) -> (i32, i32, i32, i32) {
    %c0_i32 = arith.constant 0 : i32
    %c0_i32_0 = arith.constant 0 : i32
    %c0_i32_1 = arith.constant 0 : i32
    %c0_i32_2 = arith.constant 0 : i32
    return %arg0, %c0_i32, %c0_i32_0, %c0_i32_1 : i32, i32, i32, i32
  }
  func.func @transform_1(%arg0: i32) -> (i32, i32, i32, i32) {
    %c0_i32 = arith.constant 0 : i32
    %c0_i32_0 = arith.constant 0 : i32
    %c0_i32_1 = arith.constant 0 : i32
    %c0_i32_2 = arith.constant 0 : i32
    return %arg0, %c0_i32, %c0_i32_0, %c0_i32_1 : i32, i32, i32, i32
  }
  func.func @transform_2(%arg0: i32) -> (i32, i32) {
    %c0_i32 = arith.constant 0 : i32
    %c0_i32_0 = arith.constant 0 : i32
    %c0_i32_1 = arith.constant 0 : i32
    return %c0_i32, %c0_i32_0 : i32, i32
  }
  func.func @transform_3(%arg0: i32) -> (i32, i32, i32) {
    %c0_i32 = arith.constant 0 : i32
    %c0_i32_0 = arith.constant 0 : i32
    %c0_i32_1 = arith.constant 0 : i32
    return %arg0, %c0_i32, %c0_i32_0 : i32, i32, i32
  }
}

</mosaic_0001>

<llo_original>
// kernel: av2v_routefunc_audioconvdown_forward.1
$region0: #{av2v_routefunc_audioconvdown_forward.1}
  #allocation0 [shape = 'u32[]', space=smem, size = 0x4, offset = 0x4, fixed_abs, tag = 'smem constant byte address 0x4 - core index']
  #allocation1 [shape = 'u32[72,128]{1,0:T(1,128)}', space=vmem, size = 0x9000, scoped, tag = 'internal scratch']
  %s0 = inlined_call_operand.vmem [shape: f32[2,8,8,256], index: 0, kind: input, shape index: {}]
  %s1 = inlined_call_operand.vmem [shape: f32[2,16,8,128], index: 1, kind: input, shape index: {}]
  %s2 = inlined_call_operand.vmem [shape: f32[56,128], index: 2, kind: input, shape index: {}]
  %s3 = inlined_call_operand.hbm [shape: f32[2,8,128], index: 3, kind: output, shape index: {}]
  %s4 = sld [smem:[#allocation0]]
  $region45: #{av2v_routefunc_audioconvdown_forward.1} parent=0
    _
  %s6 = ssub.s32 1, %s4
  %s7 = scalar_select 0, %s6, %s4
  $region1: #{av2v_routefunc_audioconvdown_forward.1} parent=0
    #allocation2 [shape = 'u8[8192]{0}', space=vmem, size = 0x2000, scoped, tag = 'output window, operand 0']
    #allocation3 [shape = 's32[2]{0}', space=sflag, size = 0x8, scoped, tag = 'scoped memory for av2v_routefunc_audioconvdown_forward.1']
    %8 = vsyncpa [#allocation3], 0
    %s9 = scalar_lea.sflag [#allocation3], 1
    %10 = vsyncpa %s9, 0
    loop: start=0, step=1, limit=4
    $region2: #{av2v_routefunc_audioconvdown_forward.1} parent=1 // loop_pre_header
      _
    $region3: #{av2v_routefunc_audioconvdown_forward.1} parent=1 // loop_header
      %s12 = sphi 0, %s16
      %p13 = scmp.ge.s32.totalorder %s12, 4
      %s22 = sphi 0, %s24
      %s25 = sphi 0, %s22
      %s26 = sphi 0, %s25
      %s42 = sphi 0, %s26
      %s48 = sphi 0, %s50
      %s51 = sphi 0, %s48
      %s52 = sphi 0, %s51
      %s68 = sphi 0, %s52
      %s72 = sphi 0, %s72
      %s74 = sphi 0, %s72
      %s75 = sphi 0, %s74
      %s89 = sphi 0, %s75
      %s95 = sphi 0, %s97
      %s98 = sphi 0, %s95
      %s99 = sphi 0, %s98
      %s115 = sphi 0, %s99
    $region4: #{av2v_routefunc_audioconvdown_forward.1} parent=1 // loop_header_branch
      %15 = sbr.rel (%p13) target = $region8
    $region5: #{av2v_routefunc_audioconvdown_forward.1} parent=1 // loop_body
      %s17 = ssub.s32 %s12, 1
      %s18 = ssub.s32 %s12, 2
      %s19 = sadd.s32 %s12, 1
      %s20 = ssub.s32 %s12, %s19
      %p21 = scmp.eq.s32.totalorder %s20, 0
      %s23 = sadd.s32 %s22, 1
      %s24 = scalar_select %p21, %s22, %s23
      %p27 = pneg %p21
      %p28 = scmp.eq.s32.totalorder %s12, 1
      %p29 = por %p27, %p28
      %p30 = scmp.ne.s32.totalorder %s22, %s25
      %p31 = scmp.eq.s32.totalorder %s12, 0
      %p32 = por %p30, %p31
      %p33 = scmp.ne.s32.totalorder %s22, %s25
      %p34 = scmp.eq.s32.totalorder %s17, 1
      %p35 = por %p33, %p34
      %p36 = scmp.ne.s32.totalorder %s25, %s26
      %p37 = scmp.eq.s32.totalorder %s17, 0
      %p38 = por %p36, %p37
      %p39 = scmp.ne.s32.totalorder %s25, %s26
      %p40 = scmp.eq.s32.totalorder %s18, 1
      %p41 = por %p39, %p40
      %p43 = scmp.ne.s32.totalorder %s26, %s42
      %p44 = scmp.eq.s32.totalorder %s18, 0
      %p45 = por %p43, %p44
      %s46 = ssub.s32 %s12, %s19
      %p47 = scmp.eq.s32.totalorder %s46, 0
      %s49 = sadd.s32 %s48, 1
      %s50 = scalar_select %p47, %s48, %s49
      %p53 = pneg %p47
      %p54 = scmp.eq.s32.totalorder %s12, 1
      %p55 = por %p53, %p54
      %p56 = scmp.ne.s32.totalorder %s48, %s51
      %p57 = scmp.eq.s32.totalorder %s12, 0
      %p58 = por %p56, %p57
      %p59 = scmp.ne.s32.totalorder %s48, %s51
      %p60 = scmp.eq.s32.totalorder %s17, 1
      %p61 = por %p59, %p60
      %p62 = scmp.ne.s32.totalorder %s51, %s52
      %p63 = scmp.eq.s32.totalorder %s17, 0
      %p64 = por %p62, %p63
      %p65 = scmp.ne.s32.totalorder %s51, %s52
      %p66 = scmp.eq.s32.totalorder %s18, 1
      %p67 = por %p65, %p66
      %p69 = scmp.ne.s32.totalorder %s52, %s68
      %p70 = scmp.eq.s32.totalorder %s18, 0
      %p71 = por %p69, %p70
      %s73 = sadd.s32 %s72, 1
      %p76 = scmp.eq.s32.totalorder %s12, 1
      %p77 = scmp.ne.s32.totalorder %s72, %s74
      %p78 = scmp.eq.s32.totalorder %s12, 0
      %p79 = por %p77, %p78
      %p80 = scmp.ne.s32.totalorder %s72, %s74
      %p81 = scmp.eq.s32.totalorder %s17, 1
      %p82 = por %p80, %p81
      %p83 = scmp.ne.s32.totalorder %s74, %s75
      %p84 = scmp.eq.s32.totalorder %s17, 0
      %p85 = por %p83, %p84
      %p86 = scmp.ne.s32.totalorder %s74, %s75
      %p87 = scmp.eq.s32.totalorder %s18, 1
      %p88 = por %p86, %p87
      %p90 = scmp.ne.s32.totalorder %s75, %s89
      %p91 = scmp.eq.s32.totalorder %s18, 0
      %p92 = por %p90, %p91
      %s93 = ssub.s32 %s12, %s19
      %p94 = scmp.eq.s32.totalorder %s93, 0
      %s96 = sadd.s32 %s95, 1
      %s97 = scalar_select %p94, %s95, %s96
      %p100 = pneg %p94
      %p101 = scmp.eq.s32.totalorder %s12, 1
      %p102 = por %p100, %p101
      %p103 = scmp.ne.s32.totalorder %s95, %s98
      %p104 = scmp.eq.s32.totalorder %s12, 0
      %p105 = por %p103, %p104
      %p106 = scmp.ne.s32.totalorder %s95, %s98
      %p107 = scmp.eq.s32.totalorder %s17, 1
      %p108 = por %p106, %p107
      %p109 = scmp.ne.s32.totalorder %s98, %s99
      %p110 = scmp.eq.s32.totalorder %s17, 0
      %p111 = por %p109, %p110
      %p112 = scmp.ne.s32.totalorder %s98, %s99
      %p113 = scmp.eq.s32.totalorder %s18, 1
      %p114 = por %p112, %p113
      %p116 = scmp.ne.s32.totalorder %s99, %s115
      %p117 = scmp.eq.s32.totalorder %s18, 0
      %p118 = por %p116, %p117
      %p119 = scmp.le.s32.totalorder 1, %s12
      %p120 = scmp.lt.s32.totalorder %s12, 3
      %p121 = pnand %p119, %p120
      %p122 = pneg %p121
      // Predicated region
      $region9: #{av2v_routefunc_audioconvdown_forward.1} parent=5 // pred_check
        _
      $region10: #{av2v_routefunc_audioconvdown_forward.1} parent=5 // pred_check_branch
        %124 = sbr.rel (%p121) target = $region12
      $region11: #{av2v_routefunc_audioconvdown_forward.1} parent=5 // pred_region
        %s125 = ssub.s32 %s12, 1
        // Predicated region
        $region13: #{av2v_routefunc_audioconvdown_forward.1} parent=11 // pred_check
          %p126 = pneg %p85
        $region14: #{av2v_routefunc_audioconvdown_forward.1} parent=11 // pred_check_branch
          %128 = sbr.rel (%p126) target = $region16
        $region15: #{av2v_routefunc_audioconvdown_forward.1} parent=11 // pred_region
          _
        $region16: #{av2v_routefunc_audioconvdown_forward.1} parent=11 // pred_fallthru
          _
      $region12: #{av2v_routefunc_audioconvdown_forward.1} parent=5 // pred_fallthru
        _
      %p129 = scmp.lt.s32.totalorder %s12, 2
      // Predicated region
      $region17: #{av2v_routefunc_audioconvdown_forward.1} parent=5 // pred_check
        %p130 = pneg %p129
      $region18: #{av2v_routefunc_audioconvdown_forward.1} parent=5 // pred_check_branch
        %132 = sbr.rel (%p130) target = $region20
      $region19: #{av2v_routefunc_audioconvdown_forward.1} parent=5 // pred_region
        // Predicated region
        $region21: #{av2v_routefunc_audioconvdown_forward.1} parent=19 // pred_check
          %p133 = pneg %p32
        $region22: #{av2v_routefunc_audioconvdown_forward.1} parent=19 // pred_check_branch
          %135 = sbr.rel (%p133) target = $region24
        $region23: #{av2v_routefunc_audioconvdown_forward.1} parent=19 // pred_region
          %p136 = scmp.lt.s32.totalorder %s12, 1
          %s137 = scalar_select %p136, %s12, 1
          %s138 = smul.addr %s137, 16
          %s139 = smul.addr %s138, 8
          %s140 = scalar_lea.vmem %s0, %s139
        $region24: #{av2v_routefunc_audioconvdown_forward.1} parent=19 // pred_fallthru
          _
        // Predicated region
        $region25: #{av2v_routefunc_audioconvdown_forward.1} parent=19 // pred_check
          %p141 = pneg %p58
        $region26: #{av2v_routefunc_audioconvdown_forward.1} parent=19 // pred_check_branch
          %143 = sbr.rel (%p141) target = $region28
        $region27: #{av2v_routefunc_audioconvdown_forward.1} parent=19 // pred_region
          %p144 = scmp.lt.s32.totalorder %s12, 1
          %s145 = scalar_select %p144, %s12, 1
          %s146 = smul.addr %s145, 16
          %s147 = smul.addr %s146, 8
          %s148 = scalar_lea.vmem %s1, %s147
        $region28: #{av2v_routefunc_audioconvdown_forward.1} parent=19 // pred_fallthru
          _
      $region20: #{av2v_routefunc_audioconvdown_forward.1} parent=5 // pred_fallthru
        _
      %p149 = scmp.le.s32.totalorder 1, %s12
      %p150 = scmp.lt.s32.totalorder %s12, 3
      %p151 = pnand %p149, %p150
      %p152 = pneg %p151
      // Predicated region
      $region29: #{av2v_routefunc_audioconvdown_forward.1} parent=5 // pred_check
        _
      $region30: #{av2v_routefunc_audioconvdown_forward.1} parent=5 // pred_check_branch
        %154 = sbr.rel (%p151) target = $region32
      $region31: #{av2v_routefunc_audioconvdown_forward.1} parent=5 // pred_region
        %s155 = ssub.s32 %s12, 1
        %p156 = scmp.lt.s32.totalorder %s17, 1
        %s157 = scalar_select %p156, %s17, 1
        %s158 = smul.addr %s157, 16
        %s159 = smul.addr %s158, 8
        %s160 = scalar_lea.vmem %s0, %s159
        %p161 = pneg %p38
        %p162 = pneg %p35
        %p163 = scmp.lt.s32.totalorder %s17, 1
        %s164 = scalar_select %p163, %s17, 1
        %s165 = smul.addr %s164, 16
        %s166 = smul.addr %s165, 8
        %s167 = scalar_lea.vmem %s1, %s166
        %p168 = pneg %p64
        %p169 = pneg %p61
        %p170 = pneg %p85
        %p171 = pneg %p82
        %p172 = pneg %p111
        %p173 = pneg %p108
        %s174 = sand.u32 %s98, 1
        %s175 = scalar_lea.sflag [#allocation3], %s174
        %s176 = sand.u32 %s98, 1
        %s177 = smul.addr %s176, 8
        %s178 = scalar_lea.vmem [#allocation2], %s177
        %p179 = scmp.lt.s32.totalorder %s17, 1
        %s180 = scalar_select %p179, %s17, 1
        %s181 = smul.addr %s180, 16
        %s182 = smul.addr %s181, 8
        %s183 = scalar_lea.vmem %s0, %s182
        %p184 = scmp.lt.s32.totalorder %s17, 1
        %s185 = scalar_select %p184, %s17, 1
        %s186 = smul.addr %s185, 16
        %s187 = smul.addr %s186, 8
        %s188 = scalar_lea.vmem %s1, %s187
        %v189 = vld [vmem:[%s2] sm:$0xff]
        %v190 = vld [vmem:[%s2 + $0x8] sm:$0xff]
        %v191 = vld [vmem:[%s2 + $0x10] sm:$0xff]
        %v192 = vld [vmem:[%s2 + $0x18] sm:$0xff]
        %v193 = vld [vmem:[%s2 + $0x20] sm:$0xff]
        %v194 = vld [vmem:[%s2 + $0x28] sm:$0xff]
        %v195 = vld [vmem:[%s2 + $0x30] sm:$0xff]
        %v196 = vld [vmem:[%s183] sm:$0xff]
        %v197 = vld [vmem:[%s183 + $0x8] sm:$0xff]
        %v198 = vld [vmem:[%s183 + $0x10] sm:$0xff]
        %v199 = vld [vmem:[%s183 + $0x18] sm:$0xff]
        %v200 = vld [vmem:[%s183 + $0x20] sm:$0xff]
        %v201 = vld [vmem:[%s183 + $0x28] sm:$0xff]
        %v202 = vld [vmem:[%s183 + $0x30] sm:$0xff]
        %v203 = vld [vmem:[%s183 + $0x38] sm:$0xff]
        %v204 = vld [vmem:[%s183 + $0x40] sm:$0xff]
        %v205 = vld [vmem:[%s183 + $0x48] sm:$0xff]
        %v206 = vld [vmem:[%s183 + $0x50] sm:$0xff]
        %v207 = vld [vmem:[%s183 + $0x58] sm:$0xff]
        %v208 = vld [vmem:[%s183 + $0x60] sm:$0xff]
        %v209 = vld [vmem:[%s183 + $0x68] sm:$0xff]
        %v210 = vld [vmem:[%s183 + $0x70] sm:$0xff]
        %v211 = vld [vmem:[%s183 + $0x78] sm:$0xff]
        %v212 = vadd.f32 %v196, %v197
        %213 = vadd.xlane.f32.xlu0 %v212
        %v214 = vpop.xlane.xlu0 %213
        %v215 = vadd.f32 %v198, %v199
        %216 = vadd.xlane.f32.xlu0 %v215
        %v217 = vpop.xlane.xlu0 %216
        %v218 = vadd.f32 %v200, %v201
        %219 = vadd.xlane.f32.xlu0 %v218
        %v220 = vpop.xlane.xlu0 %219
        %v221 = vadd.f32 %v202, %v203
        %222 = vadd.xlane.f32.xlu0 %v221
        %v223 = vpop.xlane.xlu0 %222
        %v224 = vadd.f32 %v204, %v205
        %225 = vadd.xlane.f32.xlu0 %v224
        %v226 = vpop.xlane.xlu0 %225
        %v227 = vadd.f32 %v206, %v207
        %228 = vadd.xlane.f32.xlu0 %v227
        %v229 = vpop.xlane.xlu0 %228
        %v230 = vadd.f32 %v208, %v209
        %231 = vadd.xlane.f32.xlu0 %v230
        %v232 = vpop.xlane.xlu0 %231
        %v233 = vadd.f32 %v210, %v211
        %234 = vadd.xlane.f32.xlu0 %v233
        %v235 = vpop.xlane.xlu0 %234
        %v236 = vrcp.pop 256.0
        %v237 = vmul.f32 256.0, %v236
        %v238 = vsub.f32 1.0, %v237
        %v239 = vmul.f32 %v236, %v238
        %v240 = vadd.f32 %v236, %v239
        %vm241 = vweird.f32 %v236
        %v242 = vsel %vm241, %v236, %v240
        %v243 = vmul.f32 %v214, %v242
        %v244 = vmul.f32 %v217, %v242
        %v245 = vmul.f32 %v220, %v242
        %v246 = vmul.f32 %v223, %v242
        %v247 = vmul.f32 %v226, %v242
        %v248 = vmul.f32 %v229, %v242
        %v249 = vmul.f32 %v232, %v242
        %v250 = vmul.f32 %v235, %v242
        %v259 = vlaneseq
        %v260 = vand.u32 %v259, 127
        %v261 = vperm.slane %v243, %v260
        %v262 = vperm.slane %v244, %v260
        %v263 = vperm.slane %v245, %v260
        %v264 = vperm.slane %v246, %v260
        %v265 = vperm.slane %v247, %v260
        %v266 = vperm.slane %v248, %v260
        %v267 = vperm.slane %v249, %v260
        %v268 = vperm.slane %v250, %v260
        %vm269 = vcmask 1041409
        %v270 = vsel %vm269, %v262, %v261
        %vm271 = vcmask 1042434
        %v272 = vsel %vm271, %v263, %v270
        %vm273 = vcmask 1043459
        %v274 = vsel %vm273, %v264, %v272
        %vm275 = vcmask 1044484
        %v276 = vsel %vm275, %v265, %v274
        %vm277 = vcmask 1045509
        %v278 = vsel %vm277, %v266, %v276
        %vm279 = vcmask 1046534
        %v280 = vsel %vm279, %v267, %v278
        %vm281 = vcmask 1047559
        %v282 = vsel %vm281, %v268, %v280
        %vm284 = vcmask 64512
        %v285 = vsel %vm284, %v282, 0.0
        %286 = vadd.xlane.f32.xlu0 %v285
        %v287 = vpop.xlane.xlu0 %286
        %v288 = vrcp.pop 8.0
        %v289 = vmul.f32 8.0, %v288
        %v290 = vsub.f32 1.0, %v289
        %v291 = vmul.f32 %v288, %v290
        %v292 = vadd.f32 %v288, %v291
        %vm293 = vweird.f32 %v288
        %v294 = vsel %vm293, %v288, %v292
        %v295 = vmul.f32 %v287, %v294
        %v297 = vsel %vm284, %v189, 0
        %299 = vmatpush.msra.mxu0 0.0
        %300 = vmatpush.msra.mxu0 0.0
        %301 = vmatpush.msra.mxu0 0.0
        %302 = vmatpush.msra.mxu0 0.0
        %303 = vmatpush.msra.mxu0 0.0
        %304 = vmatpush.msra.mxu0 0.0
        %305 = vmatpush.msra.mxu0 0.0
        %306 = vmatpush.msra.mxu0 0.0
        %307 = vmatpush.msra.mxu0 0.0
        %308 = vmatpush.msra.mxu0 0.0
        %309 = vmatpush.msra.mxu0 0.0
        %310 = vmatpush.msra.mxu0 0.0
        %311 = vmatpush.msra.mxu0 0.0
        %312 = vmatpush.msra.mxu0 0.0
        %313 = vmatpush.msra.mxu0 0.0
        %314 = vmatpush.msra.mxu0 %v295
        %315 = vmatmul.f32.gmra.mxu0 %v297
        %v316 = vpop.f32.mrf.mxu0
        %v317 = vadd.f32 %v193, %v316
        %318 = vdwg.mxu0
        %320 = vset.pattern.permute.xlu0 0
        %321 = vperm.xlu0 %320, %v317
        %v322 = vpop.permute.xlu0 %321
        %v323 = vperm.slane %v322, 0
        %v324 = vperm.slane %v322, 1
        %v325 = vperm.slane %v322, 2
        %v326 = vperm.slane %v322, 3
        %v327 = vperm.slane %v322, 4
        %v328 = vperm.slane %v322, 5
        %v329 = vperm.slane %v322, 6
        %v330 = vperm.slane %v322, 7
        %v339 = vadd.f32 %v243, %v323
        %v340 = vadd.f32 %v244, %v324
        %v341 = vadd.f32 %v245, %v325
        %v342 = vadd.f32 %v246, %v326
        %v343 = vadd.f32 %v247, %v327
        %v344 = vadd.f32 %v248, %v328
        %v345 = vadd.f32 %v249, %v329
        %v346 = vadd.f32 %v250, %v330
        %v347 = vld [vmem:[%s188] sm:$0xff]
        %v348 = vld [vmem:[%s188 + $0x8] sm:$0xff]
        %v349 = vld [vmem:[%s188 + $0x10] sm:$0xff]
        %v350 = vld [vmem:[%s188 + $0x18] sm:$0xff]
        %v351 = vld [vmem:[%s188 + $0x20] sm:$0xff]
        %v352 = vld [vmem:[%s188 + $0x28] sm:$0xff]
        %v353 = vld [vmem:[%s188 + $0x30] sm:$0xff]
        %v354 = vld [vmem:[%s188 + $0x38] sm:$0xff]
        %v355 = vld [vmem:[%s188 + $0x40] sm:$0xff]
        %v356 = vld [vmem:[%s188 + $0x48] sm:$0xff]
        %v357 = vld [vmem:[%s188 + $0x50] sm:$0xff]
        %v358 = vld [vmem:[%s188 + $0x58] sm:$0xff]
        %v359 = vld [vmem:[%s188 + $0x60] sm:$0xff]
        %v360 = vld [vmem:[%s188 + $0x68] sm:$0xff]
        %v361 = vld [vmem:[%s188 + $0x70] sm:$0xff]
        %v362 = vld [vmem:[%s188 + $0x78] sm:$0xff]
        %363 = vadd.xlane.f32.xlu0 %v347
        %v364 = vpop.xlane.xlu0 %363
        %365 = vadd.xlane.f32.xlu0 %v348
        %v366 = vpop.xlane.xlu0 %365
        %367 = vadd.xlane.f32.xlu0 %v349
        %v368 = vpop.xlane.xlu0 %367
        %369 = vadd.xlane.f32.xlu0 %v350
        %v370 = vpop.xlane.xlu0 %369
        %371 = vadd.xlane.f32.xlu0 %v351
        %v372 = vpop.xlane.xlu0 %371
        %373 = vadd.xlane.f32.xlu0 %v352
        %v374 = vpop.xlane.xlu0 %373
        %375 = vadd.xlane.f32.xlu0 %v353
        %v376 = vpop.xlane.xlu0 %375
        %377 = vadd.xlane.f32.xlu0 %v354
        %v378 = vpop.xlane.xlu0 %377
        %379 = vadd.xlane.f32.xlu0 %v355
        %v380 = vpop.xlane.xlu0 %379
        %381 = vadd.xlane.f32.xlu0 %v356
        %v382 = vpop.xlane.xlu0 %381
        %383 = vadd.xlane.f32.xlu0 %v357
        %v384 = vpop.xlane.xlu0 %383
        %385 = vadd.xlane.f32.xlu0 %v358
        %v386 = vpop.xlane.xlu0 %385
        %387 = vadd.xlane.f32.xlu0 %v359
        %v388 = vpop.xlane.xlu0 %387
        %389 = vadd.xlane.f32.xlu0 %v360
        %v390 = vpop.xlane.xlu0 %389
        %391 = vadd.xlane.f32.xlu0 %v361
        %v392 = vpop.xlane.xlu0 %391
        %393 = vadd.xlane.f32.xlu0 %v362
        %v394 = vpop.xlane.xlu0 %393
        %v395 = vrcp.pop 128.0
        %v396 = vmul.f32 128.0, %v395
        %v397 = vsub.f32 1.0, %v396
        %v398 = vmul.f32 %v395, %v397
        %v399 = vadd.f32 %v395, %v398
        %vm400 = vweird.f32 %v395
        %v401 = vsel %vm400, %v395, %v399
        %v402 = vmul.f32 %v364, %v401
        %v403 = vmul.f32 %v366, %v401
        %v404 = vmul.f32 %v368, %v401
        %v405 = vmul.f32 %v370, %v401
        %v406 = vmul.f32 %v372, %v401
        %v407 = vmul.f32 %v374, %v401
        %v408 = vmul.f32 %v376, %v401
        %v409 = vmul.f32 %v378, %v401
        %v410 = vmul.f32 %v380, %v401
        %v411 = vmul.f32 %v382, %v401
        %v412 = vmul.f32 %v384, %v401
        %v413 = vmul.f32 %v386, %v401
        %v414 = vmul.f32 %v388, %v401
        %v415 = vmul.f32 %v390, %v401
        %v416 = vmul.f32 %v392, %v401
        %v417 = vmul.f32 %v394, %v401
        %419 = vset.pattern.permute.xlu0 0
        %420 = vperm.xlu0 %419, %v194
        %v421 = vpop.permute.xlu0 %420
        %v439 = vperm.slane %v402, %v260
        %v440 = vperm.slane %v403, %v260
        %v441 = vperm.slane %v404, %v260
        %v442 = vperm.slane %v405, %v260
        %v443 = vperm.slane %v406, %v260
        %v444 = vperm.slane %v407, %v260
        %v445 = vperm.slane %v408, %v260
        %v446 = vperm.slane %v409, %v260
        %v447 = vperm.slane %v410, %v260
        %v448 = vperm.slane %v411, %v260
        %v449 = vperm.slane %v412, %v260
        %v450 = vperm.slane %v413, %v260
        %v451 = vperm.slane %v414, %v260
        %v452 = vperm.slane %v415, %v260
        %v453 = vperm.slane %v416, %v260
        %v454 = vperm.slane %v417, %v260
        %v455 = vsel %vm269, %v440, %v439
        %v456 = vsel %vm271, %v441, %v455
        %v457 = vsel %vm273, %v442, %v456
        %v458 = vsel %vm275, %v443, %v457
        %v459 = vsel %vm277, %v444, %v458
        %v460 = vsel %vm279, %v445, %v459
        %v461 = vsel %vm281, %v446, %v460
        %v462 = vsel %vm269, %v448, %v447
        %v463 = vsel %vm271, %v449, %v462
        %v464 = vsel %vm273, %v450, %v463
        %v465 = vsel %vm275, %v451, %v464
        %v466 = vsel %vm277, %v452, %v465
        %v467 = vsel %vm279, %v453, %v466
        %v468 = vsel %vm281, %v454, %v467
        %vm471 = vcmask 130048
        %v473 = vsel %vm471, %v190, 0
        %475 = vmatpush.msra.mxu0 0.0
        %476 = vmatpush.msra.mxu0 0.0
        %477 = vmatpush.msra.mxu0 0.0
        %478 = vmatpush.msra.mxu0 0.0
        %479 = vmatpush.msra.mxu0 0.0
        %480 = vmatpush.msra.mxu0 0.0
        %481 = vmatpush.msra.mxu0 0.0
        %482 = vmatpush.msra.mxu0 0.0
        %483 = vmatpush.msra.mxu0 0.0
        %484 = vmatpush.msra.mxu0 0.0
        %485 = vmatpush.msra.mxu0 0.0
        %486 = vmatpush.msra.mxu0 0.0
        %487 = vmatpush.msra.mxu0 0.0
        %488 = vmatpush.msra.mxu0 0.0
        %489 = vmatpush.msra.mxu0 %v468
        %490 = vmatpush.msra.mxu0 %v461
        %491 = vmatmul.f32.gmra.mxu0 %v473
        %v492 = vpop.f32.mrf.mxu0
        %v493 = vadd.f32 %v421, %v492
        %494 = vdwg.mxu0
        %503 = vset.pattern.permute.xlu0 0
        %504 = vperm.xlu0 %503, %v339
        %v505 = vpop.permute.xlu0 %504
        %506 = vset.pattern.permute.xlu0 0
        %507 = vperm.xlu0 %506, %v340
        %v508 = vpop.permute.xlu0 %507
        %509 = vset.pattern.permute.xlu0 0
        %510 = vperm.xlu0 %509, %v341
        %v511 = vpop.permute.xlu0 %510
        %512 = vset.pattern.permute.xlu0 0
        %513 = vperm.xlu0 %512, %v342
        %v514 = vpop.permute.xlu0 %513
        %515 = vset.pattern.permute.xlu0 0
        %516 = vperm.xlu0 %515, %v343
        %v517 = vpop.permute.xlu0 %516
        %518 = vset.pattern.permute.xlu0 0
        %519 = vperm.xlu0 %518, %v344
        %v520 = vpop.permute.xlu0 %519
        %521 = vset.pattern.permute.xlu0 0
        %522 = vperm.xlu0 %521, %v345
        %v523 = vpop.permute.xlu0 %522
        %524 = vset.pattern.permute.xlu0 0
        %525 = vperm.xlu0 %524, %v346
        %v526 = vpop.permute.xlu0 %525
        %v527 = vperm.slane %v505, %v260
        %v528 = vperm.slane %v508, %v260
        %v529 = vperm.slane %v511, %v260
        %v530 = vperm.slane %v514, %v260
        %v531 = vperm.slane %v517, %v260
        %v532 = vperm.slane %v520, %v260
        %v533 = vperm.slane %v523, %v260
        %v534 = vperm.slane %v526, %v260
        %v535 = vsel %vm269, %v528, %v527
        %v536 = vsel %vm271, %v529, %v535
        %v537 = vsel %vm273, %v530, %v536
        %v538 = vsel %vm275, %v531, %v537
        %v539 = vsel %vm277, %v532, %v538
        %v540 = vsel %vm279, %v533, %v539
        %v541 = vsel %vm281, %v534, %v540
        %544 = vrot.lane.b32.xlu0 %v541, 1
        %v545 = vpop.permute.xlu0 %544
        %546 = vrot.lane.b32.xlu0 %v493, 1
        %v547 = vpop.permute.xlu0 %546
        %vm550 = vcmask 7168
        %v551 = vsel %vm550, 0.0, %v545
        %v552 = vsel %vm550, 0.0, %v547
        %553 = vrot.lane.b32.xlu0 %v541, 127
        %v554 = vpop.permute.xlu0 %553
        %555 = vrot.lane.b32.xlu0 %v493, 127
        %v556 = vpop.permute.xlu0 %555
        %vm559 = vcmask 56320
        %v560 = vsel %vm559, %v554, 0.0
        %v561 = vsel %vm559, %v556, 0.0
        %563 = vset.pattern.permute.xlu0 0
        %564 = vperm.xlu0 %563, %v195
        %v565 = vpop.permute.xlu0 %564
        %vm567 = vcmask 392192
        %v569 = vsel %vm567, %v191, 0
        %571 = vmatpush.msra.mxu0 0.0
        %572 = vmatpush.msra.mxu0 0.0
        %573 = vmatpush.msra.mxu0 0.0
        %574 = vmatpush.msra.mxu0 0.0
        %575 = vmatpush.msra.mxu0 0.0
        %576 = vmatpush.msra.mxu0 0.0
        %577 = vmatpush.msra.mxu0 0.0
        %578 = vmatpush.msra.mxu0 0.0
        %579 = vmatpush.msra.mxu0 0.0
        %580 = vmatpush.msra.mxu0 0.0
        %581 = vmatpush.msra.mxu0 %v561
        %582 = vmatpush.msra.mxu0 %v560
        %583 = vmatpush.msra.mxu0 %v493
        %584 = vmatpush.msra.mxu0 %v541
        %585 = vmatpush.msra.mxu0 %v552
        %586 = vmatpush.msra.mxu0 %v551
        %587 = vmatmul.f32.gmra.mxu0 %v569
        %v588 = vpop.f32.mrf.mxu0
        %v589 = vadd.f32 %v565, %v588
        %590 = vdwg.mxu0
        %v591 = vmax.f32 %v589, 0.0
        %593 = vrot.lane.b32.xlu0 %v591, 1
        %v594 = vpop.permute.xlu0 %593
        %v596 = vsel %vm550, 0.0, %v594
        %597 = vrot.lane.b32.xlu0 %v591, 127
        %v598 = vpop.permute.xlu0 %597
        %v600 = vsel %vm559, %v598, 0.0
        %vm601 = vcmask 195584
        %v603 = vsel %vm601, %v192, 0
        %605 = vmatpush.msra.mxu0 0.0
        %606 = vmatpush.msra.mxu0 0.0
        %607 = vmatpush.msra.mxu0 0.0
        %608 = vmatpush.msra.mxu0 0.0
        %609 = vmatpush.msra.mxu0 0.0
        %610 = vmatpush.msra.mxu0 0.0
        %611 = vmatpush.msra.mxu0 0.0
        %612 = vmatpush.msra.mxu0 0.0
        %613 = vmatpush.msra.mxu0 0.0
        %614 = vmatpush.msra.mxu0 0.0
        %615 = vmatpush.msra.mxu0 0.0
        %616 = vmatpush.msra.mxu0 0.0
        %617 = vmatpush.msra.mxu0 0.0
        %618 = vmatpush.msra.mxu0 %v600
        %619 = vmatpush.msra.mxu0 %v591
        %620 = vmatpush.msra.mxu0 %v596
        %621 = vmatmul.f32.gmra.mxu0 %v603
        %v622 = vpop.f32.mrf.mxu0
        %v623 = vadd.f32 1.0, %v622
        %624 = vdwg.mxu0
        %v625 = vsel %vm284, %v623, 0.0
        %626 = vst [vmem:[%s178] sm:$0xff] %v625
        %s627 = sand.u32 %s98, 1
        %s628 = scalar_lea.sflag [#allocation3], %s627
        %s629 = sand.u32 %s98, 1
        %s630 = smul.addr %s629, 8
        %s631 = scalar_lea.vmem [#allocation2], %s630
        // Predicated region
        $region33: #{av2v_routefunc_audioconvdown_forward.1} parent=31 // pred_check
          %p632 = pneg %p108
        $region34: #{av2v_routefunc_audioconvdown_forward.1} parent=31 // pred_check_branch
          %634 = sbr.rel (%p632) target = $region36
        $region35: #{av2v_routefunc_audioconvdown_forward.1} parent=31 // pred_region
          %636 = vsyncadd %s628, 0
          %s637 = smul.addr %s17, 8
          %s638 = scalar_lea.hbm %s3, %s637
          %s640 = sshll.u32 %s631, 4
          %s641 = int_to_ptr.vmem [resolvable:$true] %s640
          %s642 = sshll.u32 %s638, 4
          %s643 = int_to_ptr.hbm [resolvable:$true] %s642
          %645 = dma.vmem_to_hbm [thread:$0]  %s641, 128, %s643, %s628
        $region36: #{av2v_routefunc_audioconvdown_forward.1} parent=31 // pred_fallthru
          _
      $region32: #{av2v_routefunc_audioconvdown_forward.1} parent=5 // pred_fallthru
        _
      %p646 = scmp.le.s32.totalorder 2, %s12
      // Predicated region
      $region37: #{av2v_routefunc_audioconvdown_forward.1} parent=5 // pred_check
        %p647 = pneg %p646
      $region38: #{av2v_routefunc_audioconvdown_forward.1} parent=5 // pred_check_branch
        %649 = sbr.rel (%p647) target = $region40
      $region39: #{av2v_routefunc_audioconvdown_forward.1} parent=5 // pred_region
        %s650 = ssub.s32 %s12, 2
        // Predicated region
        $region41: #{av2v_routefunc_audioconvdown_forward.1} parent=39 // pred_check
          %p651 = pneg %p114
        $region42: #{av2v_routefunc_audioconvdown_forward.1} parent=39 // pred_check_branch
          %653 = sbr.rel (%p651) target = $region44
        $region43: #{av2v_routefunc_audioconvdown_forward.1} parent=39 // pred_region
          %s654 = sand.u32 %s99, 1
          %s655 = scalar_lea.sflag [#allocation3], %s654
          %s656 = sand.u32 %s99, 1
          %s657 = smul.addr %s656, 8
          %s658 = scalar_lea.vmem [#allocation2], %s657
          %660 = dma.done %s655, 128
        $region44: #{av2v_routefunc_audioconvdown_forward.1} parent=39 // pred_fallthru
          _
      $region40: #{av2v_routefunc_audioconvdown_forward.1} parent=5 // pred_fallthru
        _
    $region6: #{av2v_routefunc_audioconvdown_forward.1} parent=1 // loop_footer
      %s16 = sadd.s32 1, %s12
    $region7: #{av2v_routefunc_audioconvdown_forward.1} parent=1 // loop_footer_branch
      %11 = sbr.rel target = $region3
    $region8: #{av2v_routefunc_audioconvdown_forward.1} parent=1 // loop_exit
      _
    %661 = vsyncpa [#allocation3], 1
    %s662 = scalar_lea.sflag [#allocation3], 1
    %663 = vsyncpa %s662, 1

</llo_original>
